<compile_context>
chip_gen: v7x
topology: tpu7x:2x2x1
jax: 0.10.0
libtpu: 0.0.40
codegen_flags: <defaults>
</compile_context>

<pallas_src>
import functools

import jax
import jax.numpy as jnp
from jax.experimental import pallas as pl
from jax.experimental.pallas import tpu as pltpu


def _prelu_complex_kernel(xr_ref, xi_ref, w_ref, or_ref, oi_ref):
    w = w_ref[...]            # (TR, 1) per-row slope, broadcasts over lanes.
    xr = xr_ref[...]          # (TR, TL)
    xi = xi_ref[...]          # (TR, TL)
    or_ref[...] = jnp.where(xr >= 0, xr, w * xr)
    oi_ref[...] = jnp.where(xi >= 0, xi, w * xi)


def _round_up(a: int, b: int) -> int:
    return ((a + b - 1) // b) * b


def _shrink_aligned(val: int, floor: int, align: int) -> int:
    """Roughly halve `val`, keeping it a multiple of `align` and >= floor."""
    new = max(floor, _round_up(val // 2, align))
    return new if new < val else val


@functools.partial(jax.jit, static_argnames=("tile_rows", "tile_lanes"))
def prelu_complex(x, weight, *, tile_rows=256, tile_lanes=4096):
    """Complex PReLU. x: complex (N, C, H, W); weight: f32 (C,) or (1,).

    Computation is done in float32 / complex64 (complex128 inputs downcast).
    """
    N, C, H, W = x.shape
    NC, HW = N * C, H * W

    xr = jnp.real(x).astype(jnp.float32).reshape(NC, HW)
    xi = jnp.imag(x).astype(jnp.float32).reshape(NC, HW)

    # One slope per (batch, channel) row (tiny glue, not on the hot path).
    w = weight.astype(jnp.float32).reshape(-1)
    if w.shape[0] == 1:
        w_rows = jnp.broadcast_to(w, (NC,))
    else:  # per-channel slopes, tiled over the batch dim
        w_rows = jnp.broadcast_to(w[None, :], (N, C)).reshape(NC)
    w_rows = w_rows.reshape(NC, 1)

    # Tile sizes: multiples of (8, 128) (BlockSpec constraint), clamped so a
    # single tile never vastly exceeds the problem size.  The arrays are NOT
    # padded: partial edge blocks are handled by Pallas with masked stores.
    TR = min(tile_rows, _round_up(NC, 8))
    TL = min(tile_lanes, _round_up(HW, 128))

    # v7x has two TensorCores — make sure there are >= 2 parallel grid steps.
    while pl.cdiv(NC, TR) * pl.cdiv(HW, TL) < 2:
        if TL > 128:
            TL = _shrink_aligned(TL, 128, 128)
        elif TR > 8:
            TR = _shrink_aligned(TR, 8, 8)
        else:
            break  # problem is a single minimal tile; nothing to split.

    grid = (pl.cdiv(NC, TR), pl.cdiv(HW, TL))  # lane axis innermost -> weight
                                               # block index constant per sweep.

    # VMEM budget: ~2.5x the per-step block bytes (4 f32 streams + slopes),
    # clamped to [16 MiB, 40 MiB] so v5e gets full double-buffering and v7x's
    # 64 MiB part keeps headroom for compiler-internal scratch.
    step_bytes = 4 * TR * TL * 4 + TR * 4
    vmem_limit = min(40 * 1024 * 1024, max(int(2.5 * step_bytes), 16 * 1024 * 1024))

    # Advisory cost for XLA scheduling of the surrounding glue ops.
    cost = pl.CostEstimate(
        flops=4 * NC * HW,
        transcendentals=0,
        bytes_accessed=16 * NC * HW + 8 * NC,
    )

    out_r, out_i = pl.pallas_call(
        _prelu_complex_kernel,
        out_shape=(
            jax.ShapeDtypeStruct((NC, HW), jnp.float32),
            jax.ShapeDtypeStruct((NC, HW), jnp.float32),
        ),
        grid_spec=pltpu.PrefetchScalarGridSpec(
            num_scalar_prefetch=0,
            grid=grid,
            in_specs=[
                pl.BlockSpec((TR, TL), lambda i, j: (i, j)),
                pl.BlockSpec((TR, TL), lambda i, j: (i, j)),
                pl.BlockSpec((TR, 1), lambda i, j: (i, 0)),
            ],
            out_specs=[
                pl.BlockSpec((TR, TL), lambda i, j: (i, j)),
                pl.BlockSpec((TR, TL), lambda i, j: (i, j)),
            ],
        ),
        compiler_params=pltpu.CompilerParams(
            dimension_semantics=("parallel", "parallel"),
            vmem_limit_bytes=vmem_limit,
            allow_input_fusion=[True, True, False],
        ),
        cost_estimate=cost,
    )(xr, xi, w_rows)

    out_r = out_r.reshape(N, C, H, W)
    out_i = out_i.reshape(N, C, H, W)
    # lax.complex(f32, f32) -> complex64.
    return jax.lax.complex(out_r, out_i)


if __name__ == "__main__":
    # Module params: num_parameters = C, init = 0.25 (as in __init__).
    N, C, H, W = 2, 4, 16, 16
    num_parameters = C
    init = 0.25
    weight = jnp.full((num_parameters,), init, dtype=jnp.float32)

    key = jax.random.PRNGKey(0)
    kr, ki = jax.random.split(key)
    x_real = jax.random.normal(kr, (N, C, H, W), dtype=jnp.float32)
    x_imag = jax.random.normal(ki, (N, C, H, W), dtype=jnp.float32)
    x = jax.lax.complex(x_real, x_imag)  # complex64

    out = jax.block_until_ready(prelu_complex(x, weight))

    # Reference check against plain-JAX PReLU semantics.
    w_b = weight.reshape(1, C, 1, 1)
    ref_r = jnp.where(x_real >= 0, x_real, w_b * x_real)
    ref_i = jnp.where(x_imag >= 0, x_imag, w_b * x_imag)
    ref = jax.lax.complex(ref_r, ref_i)
    assert out.dtype == jnp.complex64, out.dtype
    assert jnp.allclose(out, ref, atol=1e-6, rtol=1e-6), "mismatch vs reference"

    print("KERNEL_OK")
</pallas_src>

<mosaic_0001>
module attributes {stable_mosaic.version = 11 : i64} {
  func.func @_prelu_complex_kernel(%arg0: i32, %arg1: i32, %arg2: memref<8x128xf32, #tpu.memory_space<vmem>>, %arg3: memref<8x128xf32, #tpu.memory_space<vmem>>, %arg4: memref<8x1xf32, #tpu.memory_space<vmem>>, %arg5: memref<8x128xf32, #tpu.memory_space<vmem>>, %arg6: memref<8x128xf32, #tpu.memory_space<vmem>>) attributes {dimension_semantics = [#tpu.dimension_semantics<parallel>, #tpu.dimension_semantics<parallel>], iteration_bounds = array<i64: 1, 2>, scalar_prefetch = 0 : i64, scratch_operands = 0 : i64, tpu.core_type = #tpu.core_type<tc>, window_params = [{transform_indices = @transform_0, window_bounds = array<i64: 8, 128>}, {transform_indices = @transform_1, window_bounds = array<i64: 8, 128>}, {transform_indices = @transform_2, window_bounds = array<i64: 8, 1>}, {transform_indices = @transform_3, window_bounds = array<i64: 8, 128>}, {transform_indices = @transform_4, window_bounds = array<i64: 8, 128>}]} {
    %c0 = arith.constant 0 : index
    %c0_0 = arith.constant 0 : index
    %0 = vector.load %arg4[%c0, %c0_0] : memref<8x1xf32, #tpu.memory_space<vmem>>, vector<8x1xf32>
    %c0_1 = arith.constant 0 : index
    %c0_2 = arith.constant 0 : index
    %1 = vector.load %arg2[%c0_1, %c0_2] : memref<8x128xf32, #tpu.memory_space<vmem>>, vector<8x128xf32>
    %c0_3 = arith.constant 0 : index
    %c0_4 = arith.constant 0 : index
    %2 = vector.load %arg3[%c0_3, %c0_4] : memref<8x128xf32, #tpu.memory_space<vmem>>, vector<8x128xf32>
    %cst = arith.constant 0.000000e+00 : f32
    %3 = vector.broadcast %cst : f32 to vector<8x128xf32>
    %4 = arith.cmpf oge, %1, %3 : vector<8x128xf32>
    %5 = vector.broadcast %0 : vector<8x1xf32> to vector<8x128xf32>
    %6 = arith.mulf %5, %1 : vector<8x128xf32>
    %7 = arith.select %4, %1, %6 : vector<8x128xi1>, vector<8x128xf32>
    %c0_5 = arith.constant 0 : index
    %c0_6 = arith.constant 0 : index
    %8 = vector.load %arg5[%c0_5, %c0_6] : memref<8x128xf32, #tpu.memory_space<vmem>>, vector<8x128xf32>
    tpu.vector_store %arg5[%c0_5, %c0_6], %7 {strides = array<i32>} : memref<8x128xf32, #tpu.memory_space<vmem>>, vector<8x128xf32>,
    %cst_7 = arith.constant 0.000000e+00 : f32
    %9 = vector.broadcast %cst_7 : f32 to vector<8x128xf32>
    %10 = arith.cmpf oge, %2, %9 : vector<8x128xf32>
    %11 = vector.broadcast %0 : vector<8x1xf32> to vector<8x128xf32>
    %12 = arith.mulf %11, %2 : vector<8x128xf32>
    %13 = arith.select %10, %2, %12 : vector<8x128xi1>, vector<8x128xf32>
    %c0_8 = arith.constant 0 : index
    %c0_9 = arith.constant 0 : index
    %14 = vector.load %arg6[%c0_8, %c0_9] : memref<8x128xf32, #tpu.memory_space<vmem>>, vector<8x128xf32>
    tpu.vector_store %arg6[%c0_8, %c0_9], %13 {strides = array<i32>} : memref<8x128xf32, #tpu.memory_space<vmem>>, vector<8x128xf32>,
    return
  }
  func.func @transform_0(%arg0: i32, %arg1: i32) -> (i32, i32) {
    %c0_i32 = arith.constant 0 : i32
    return %arg0, %arg1 : i32, i32
  }
  func.func @transform_1(%arg0: i32, %arg1: i32) -> (i32, i32) {
    %c0_i32 = arith.constant 0 : i32
    return %arg0, %arg1 : i32, i32
  }
  func.func @transform_2(%arg0: i32, %arg1: i32) -> (i32, i32) {
    %c0_i32 = arith.constant 0 : i32
    %c0_i32_0 = arith.constant 0 : i32
    return %arg0, %c0_i32 : i32, i32
  }
  func.func @transform_3(%arg0: i32, %arg1: i32) -> (i32, i32) {
    %c0_i32 = arith.constant 0 : i32
    return %arg0, %arg1 : i32, i32
  }
  func.func @transform_4(%arg0: i32, %arg1: i32) -> (i32, i32) {
    %c0_i32 = arith.constant 0 : i32
    return %arg0, %arg1 : i32, i32
  }
}

</mosaic_0001>

<llo_original>
// kernel: custom-call.1
$region0: #{custom-call.1}
  %s0 = inlined_call_operand.hbm [shape: c64[2,4,16,16], index: 0, kind: input, shape index: {}]
  %s1 = inlined_call_operand.vmem [shape: f32[2,4,16,16], index: 1, kind: output, shape index: {}]
  %s2 = scalar_lea.hbm %s0, 2048
  $region1: #{custom-call.1} parent=0
    #allocation0 [shape = 's32[1]{0}', space=sflag, size = 0x4, scoped, tag = 'scoped memory for custom-call.1']
    %3 = vsyncpa [#allocation0], 0
    %s4 = sshll.u32 %s1, 4
    %s5 = int_to_ptr.vmem [resolvable:$true] %s4
    %7 = dma.hbm_to_vmem [thread:$0]  %s2, 2048, %s5, [#allocation0]
    %8 = dma.done [#allocation0], 2048
    %9 = vsyncpa [#allocation0], 1

// kernel: custom-call
$region0: #{custom-call}
  %s0 = inlined_call_operand.hbm [shape: c64[2,4,16,16], index: 0, kind: input, shape index: {}]
  %s1 = inlined_call_operand.vmem [shape: f32[2,4,16,16], index: 1, kind: output, shape index: {}]
  $region1: #{custom-call} parent=0
    #allocation0 [shape = 's32[1]{0}', space=sflag, size = 0x4, scoped, tag = 'scoped memory for custom-call']
    %2 = vsyncpa [#allocation0], 0
    %s3 = sshll.u32 %s1, 4
    %s4 = int_to_ptr.vmem [resolvable:$true] %s3
    %6 = dma.hbm_to_vmem [thread:$0]  %s0, 2048, %s4, [#allocation0]
    %7 = dma.done [#allocation0], 2048
    %8 = vsyncpa [#allocation0], 1

// kernel: custom-call.2
$region0: #{custom-call.2}
  %s0 = inlined_call_operand.vmem [shape: f32[2,4,16,16], index: 0, kind: input, shape index: {}]
  %s1 = inlined_call_operand.vmem [shape: f32[2,4,16,16], index: 1, kind: input, shape index: {}]
  %s2 = inlined_call_operand.hbm [shape: c64[2,4,16,16], index: 2, kind: output, shape index: {}]
  %s3 = scalar_lea.hbm %s2, 2048
  $region1: #{custom-call.2} parent=0
    #allocation0 [shape = 's32[1]{0}', space=sflag, size = 0x4, scoped, tag = 'scoped memory for custom-call.2']
    %4 = vsyncpa [#allocation0], 0
    %s5 = sshll.u32 %s0, 4
    %s6 = int_to_ptr.vmem [resolvable:$true] %s5
    %8 = dma.vmem_to_hbm [thread:$0]  %s6, 2048, %s2, [#allocation0]
    %9 = dma.done [#allocation0], 2048
    %10 = vsyncpa [#allocation0], 1
  $region2: #{custom-call.2} parent=0
    #allocation1 [shape = 's32[1]{0}', space=sflag, size = 0x4, scoped, tag = 'scoped memory for custom-call.2']
    %11 = vsyncpa [#allocation1], 0
    %s12 = sshll.u32 %s1, 4
    %s13 = int_to_ptr.vmem [resolvable:$true] %s12
    %15 = dma.vmem_to_hbm [thread:$0]  %s13, 2048, %s3, [#allocation1]
    %16 = dma.done [#allocation1], 2048
    %17 = vsyncpa [#allocation1], 1

// kernel: prelu_complex.1
$region0: #{prelu_complex.1}
  #allocation0 [shape = 'u32[]', space=smem, size = 0x4, offset = 0x4, fixed_abs, tag = 'smem constant byte address 0x4 - core index']
  #allocation1 [shape = 'u32[144,128]{1,0:T(1,128)}', space=vmem, size = 0x12000, scoped, tag = 'internal scratch']
  %s0 = inlined_call_operand.vmem [shape: f32[8,256], index: 0, kind: input, shape index: {}]
  %s1 = inlined_call_operand.vmem [shape: f32[8,256], index: 1, kind: input, shape index: {}]
  %s2 = inlined_call_operand.vmem [shape: f32[8,1], index: 2, kind: input, shape index: {}]
  %s3 = inlined_call_operand.vmem [shape: f32[8,256], index: 3, kind: output, shape index: {0}]
  %s4 = inlined_call_operand.vmem [shape: f32[8,256], index: 4, kind: output, shape index: {1}]
  %5 = xla_tuple %s3, %s4
  %s6 = sld [smem:[#allocation0]]
  $region53: #{prelu_complex.1} parent=0
    _
  %s8 = ssub.s32 1, %s6
  %s9 = scalar_select 0, %s8, %s6
  loop: start=0, step=1, limit=4
  $region2: #{prelu_complex.1} parent=0 // loop_pre_header
    _
  $region3: #{prelu_complex.1} parent=0 // loop_header
    %s11 = sphi 0, %s15
    %p12 = scmp.ge.s32.totalorder %s11, 4
    %s18 = sphi 0, %s30
    %s19 = sphi 0, %s26
    %s20 = sphi 0, %s18
    %s21 = sphi 0, %s19
    %s22 = sphi 0, %s20
    %s23 = sphi 0, %s21
    %s35 = sphi 0, %s37
    %s38 = sphi 0, %s35
    %s39 = sphi 0, %s38
    %s55 = sphi 0, %s39
    %s63 = sphi 0, %s65
    %s66 = sphi 0, %s63
    %s67 = sphi 0, %s66
    %s83 = sphi 0, %s67
    %s89 = sphi 0, %s91
    %s92 = sphi 0, %s89
    %s93 = sphi 0, %s92
    %s109 = sphi 0, %s93
    %s117 = sphi 0, %s119
    %s120 = sphi 0, %s117
    %s121 = sphi 0, %s120
    %s137 = sphi 0, %s121
    %s145 = sphi 0, %s147
    %s148 = sphi 0, %s145
    %s149 = sphi 0, %s148
    %s165 = sphi 0, %s149
  $region4: #{prelu_complex.1} parent=0 // loop_header_branch
    %14 = sbr.rel (%p12) target = $region8
  $region5: #{prelu_complex.1} parent=0 // loop_body
    %s16 = ssub.s32 %s11, 1
    %s17 = ssub.s32 %s11, 2
    %s24 = sadd.s32 1, %s19
    %p25 = scmp.ge.s32.totalorder %s24, 2
    %s26 = scalar_select %p25, 0, %s24
    %s27 = sadd.s32 1, %s18
    %s28 = scalar_select %p25, %s27, %s18
    %p29 = scmp.ge.s32.totalorder %s28, 1
    %s30 = scalar_select %p29, 0, %s28
    %s31 = ssub.s32 %s18, %s30
    %s32 = ssub.s32 %s19, %s26
    %s33 = sor.u32 %s31, %s32
    %p34 = scmp.eq.s32.totalorder %s33, 0
    %s36 = sadd.s32 %s35, 1
    %s37 = scalar_select %p34, %s35, %s36
    %p40 = pneg %p34
    %p41 = scmp.eq.s32.totalorder %s11, 1
    %p42 = por %p40, %p41
    %p43 = scmp.ne.s32.totalorder %s35, %s38
    %p44 = scmp.eq.s32.totalorder %s11, 0
    %p45 = por %p43, %p44
    %p46 = scmp.ne.s32.totalorder %s35, %s38
    %p47 = scmp.eq.s32.totalorder %s16, 1
    %p48 = por %p46, %p47
    %p49 = scmp.ne.s32.totalorder %s38, %s39
    %p50 = scmp.eq.s32.totalorder %s16, 0
    %p51 = por %p49, %p50
    %p52 = scmp.ne.s32.totalorder %s38, %s39
    %p53 = scmp.eq.s32.totalorder %s17, 1
    %p54 = por %p52, %p53
    %p56 = scmp.ne.s32.totalorder %s39, %s55
    %p57 = scmp.eq.s32.totalorder %s17, 0
    %p58 = por %p56, %p57
    %s59 = ssub.s32 %s18, %s30
    %s60 = ssub.s32 %s19, %s26
    %s61 = sor.u32 %s59, %s60
    %p62 = scmp.eq.s32.totalorder %s61, 0
    %s64 = sadd.s32 %s63, 1
    %s65 = scalar_select %p62, %s63, %s64
    %p68 = pneg %p62
    %p69 = scmp.eq.s32.totalorder %s11, 1
    %p70 = por %p68, %p69
    %p71 = scmp.ne.s32.totalorder %s63, %s66
    %p72 = scmp.eq.s32.totalorder %s11, 0
    %p73 = por %p71, %p72
    %p74 = scmp.ne.s32.totalorder %s63, %s66
    %p75 = scmp.eq.s32.totalorder %s16, 1
    %p76 = por %p74, %p75
    %p77 = scmp.ne.s32.totalorder %s66, %s67
    %p78 = scmp.eq.s32.totalorder %s16, 0
    %p79 = por %p77, %p78
    %p80 = scmp.ne.s32.totalorder %s66, %s67
    %p81 = scmp.eq.s32.totalorder %s17, 1
    %p82 = por %p80, %p81
    %p84 = scmp.ne.s32.totalorder %s67, %s83
    %p85 = scmp.eq.s32.totalorder %s17, 0
    %p86 = por %p84, %p85
    %s87 = ssub.s32 %s18, %s30
    %p88 = scmp.eq.s32.totalorder %s87, 0
    %s90 = sadd.s32 %s89, 1
    %s91 = scalar_select %p88, %s89, %s90
    %p94 = pneg %p88
    %p95 = scmp.eq.s32.totalorder %s11, 1
    %p96 = por %p94, %p95
    %p97 = scmp.ne.s32.totalorder %s89, %s92
    %p98 = scmp.eq.s32.totalorder %s11, 0
    %p99 = por %p97, %p98
    %p100 = scmp.ne.s32.totalorder %s89, %s92
    %p101 = scmp.eq.s32.totalorder %s16, 1
    %p102 = por %p100, %p101
    %p103 = scmp.ne.s32.totalorder %s92, %s93
    %p104 = scmp.eq.s32.totalorder %s16, 0
    %p105 = por %p103, %p104
    %p106 = scmp.ne.s32.totalorder %s92, %s93
    %p107 = scmp.eq.s32.totalorder %s17, 1
    %p108 = por %p106, %p107
    %p110 = scmp.ne.s32.totalorder %s93, %s109
    %p111 = scmp.eq.s32.totalorder %s17, 0
    %p112 = por %p110, %p111
    %s113 = ssub.s32 %s18, %s30
    %s114 = ssub.s32 %s19, %s26
    %s115 = sor.u32 %s113, %s114
    %p116 = scmp.eq.s32.totalorder %s115, 0
    %s118 = sadd.s32 %s117, 1
    %s119 = scalar_select %p116, %s117, %s118
    %p122 = pneg %p116
    %p123 = scmp.eq.s32.totalorder %s11, 1
    %p124 = por %p122, %p123
    %p125 = scmp.ne.s32.totalorder %s117, %s120
    %p126 = scmp.eq.s32.totalorder %s11, 0
    %p127 = por %p125, %p126
    %p128 = scmp.ne.s32.totalorder %s117, %s120
    %p129 = scmp.eq.s32.totalorder %s16, 1
    %p130 = por %p128, %p129
    %p131 = scmp.ne.s32.totalorder %s120, %s121
    %p132 = scmp.eq.s32.totalorder %s16, 0
    %p133 = por %p131, %p132
    %p134 = scmp.ne.s32.totalorder %s120, %s121
    %p135 = scmp.eq.s32.totalorder %s17, 1
    %p136 = por %p134, %p135
    %p138 = scmp.ne.s32.totalorder %s121, %s137
    %p139 = scmp.eq.s32.totalorder %s17, 0
    %p140 = por %p138, %p139
    %s141 = ssub.s32 %s18, %s30
    %s142 = ssub.s32 %s19, %s26
    %s143 = sor.u32 %s141, %s142
    %p144 = scmp.eq.s32.totalorder %s143, 0
    %s146 = sadd.s32 %s145, 1
    %s147 = scalar_select %p144, %s145, %s146
    %p150 = pneg %p144
    %p151 = scmp.eq.s32.totalorder %s11, 1
    %p152 = por %p150, %p151
    %p153 = scmp.ne.s32.totalorder %s145, %s148
    %p154 = scmp.eq.s32.totalorder %s11, 0
    %p155 = por %p153, %p154
    %p156 = scmp.ne.s32.totalorder %s145, %s148
    %p157 = scmp.eq.s32.totalorder %s16, 1
    %p158 = por %p156, %p157
    %p159 = scmp.ne.s32.totalorder %s148, %s149
    %p160 = scmp.eq.s32.totalorder %s16, 0
    %p161 = por %p159, %p160
    %p162 = scmp.ne.s32.totalorder %s148, %s149
    %p163 = scmp.eq.s32.totalorder %s17, 1
    %p164 = por %p162, %p163
    %p166 = scmp.ne.s32.totalorder %s149, %s165
    %p167 = scmp.eq.s32.totalorder %s17, 0
    %p168 = por %p166, %p167
    %p169 = scmp.le.s32.totalorder 1, %s11
    %p170 = scmp.lt.s32.totalorder %s11, 3
    %p171 = pnand %p169, %p170
    %p172 = pneg %p171
    // Predicated region
    $region9: #{prelu_complex.1} parent=5 // pred_check
      _
    $region10: #{prelu_complex.1} parent=5 // pred_check_branch
      %174 = sbr.rel (%p171) target = $region12
    $region11: #{prelu_complex.1} parent=5 // pred_region
      %s175 = ssub.s32 %s11, 1
      // Predicated region
      $region13: #{prelu_complex.1} parent=11 // pred_check
        %p176 = pneg %p105
      $region14: #{prelu_complex.1} parent=11 // pred_check_branch
        %178 = sbr.rel (%p176) target = $region16
      $region15: #{prelu_complex.1} parent=11 // pred_region
        %p179 = scmp.lt.s32.totalorder %s20, 0
        %s180 = scalar_select %p179, %s20, 0
        %s181 = smul.addr %s180, 8
        %s182 = scalar_lea.vmem %s2, %s181
      $region16: #{prelu_complex.1} parent=11 // pred_fallthru
        _
    $region12: #{prelu_complex.1} parent=5 // pred_fallthru
      _
    %p183 = scmp.lt.s32.totalorder %s11, 2
    // Predicated region
    $region17: #{prelu_complex.1} parent=5 // pred_check
      %p184 = pneg %p183
    $region18: #{prelu_complex.1} parent=5 // pred_check_branch
      %186 = sbr.rel (%p184) target = $region20
    $region19: #{prelu_complex.1} parent=5 // pred_region
      // Predicated region
      $region21: #{prelu_complex.1} parent=19 // pred_check
        %p187 = pneg %p45
      $region22: #{prelu_complex.1} parent=19 // pred_check_branch
        %189 = sbr.rel (%p187) target = $region24
      $region23: #{prelu_complex.1} parent=19 // pred_region
        %p190 = scmp.lt.s32.totalorder %s18, 0
        %s191 = scalar_select %p190, %s18, 0
        %p192 = scmp.lt.s32.totalorder %s19, 1
        %s193 = scalar_select %p192, %s19, 1
        %s194 = smul.addr %s191, 2
        %s195 = sadd.s32 %s193, %s194
        %s196 = smul.addr %s195, 8
        %s197 = scalar_lea.vmem %s0, %s196
      $region24: #{prelu_complex.1} parent=19 // pred_fallthru
        _
      // Predicated region
      $region25: #{prelu_complex.1} parent=19 // pred_check
        %p198 = pneg %p73
      $region26: #{prelu_complex.1} parent=19 // pred_check_branch
        %200 = sbr.rel (%p198) target = $region28
      $region27: #{prelu_complex.1} parent=19 // pred_region
        %p201 = scmp.lt.s32.totalorder %s18, 0
        %s202 = scalar_select %p201, %s18, 0
        %p203 = scmp.lt.s32.totalorder %s19, 1
        %s204 = scalar_select %p203, %s19, 1
        %s205 = smul.addr %s202, 2
        %s206 = sadd.s32 %s204, %s205
        %s207 = smul.addr %s206, 8
        %s208 = scalar_lea.vmem %s1, %s207
      $region28: #{prelu_complex.1} parent=19 // pred_fallthru
        _
    $region20: #{prelu_complex.1} parent=5 // pred_fallthru
      _
    %p209 = scmp.le.s32.totalorder 1, %s11
    %p210 = scmp.lt.s32.totalorder %s11, 3
    %p211 = pnand %p209, %p210
    %p212 = pneg %p211
    // Predicated region
    $region29: #{prelu_complex.1} parent=5 // pred_check
      _
    $region30: #{prelu_complex.1} parent=5 // pred_check_branch
      %214 = sbr.rel (%p211) target = $region32
    $region31: #{prelu_complex.1} parent=5 // pred_region
      %s215 = ssub.s32 %s11, 1
      %p216 = scmp.lt.s32.totalorder %s20, 0
      %s217 = scalar_select %p216, %s20, 0
      %p218 = scmp.lt.s32.totalorder %s21, 1
      %s219 = scalar_select %p218, %s21, 1
      %s220 = smul.addr %s217, 2
      %s221 = sadd.s32 %s219, %s220
      %s222 = smul.addr %s221, 8
      %s223 = scalar_lea.vmem %s0, %s222
      %p224 = pneg %p51
      %p225 = pneg %p48
      %p226 = scmp.lt.s32.totalorder %s20, 0
      %s227 = scalar_select %p226, %s20, 0
      %p228 = scmp.lt.s32.totalorder %s21, 1
      %s229 = scalar_select %p228, %s21, 1
      %s230 = smul.addr %s227, 2
      %s231 = sadd.s32 %s229, %s230
      %s232 = smul.addr %s231, 8
      %s233 = scalar_lea.vmem %s1, %s232
      %p234 = pneg %p79
      %p235 = pneg %p76
      %p236 = scmp.lt.s32.totalorder %s20, 0
      %s237 = scalar_select %p236, %s20, 0
      %s238 = smul.addr %s237, 8
      %s239 = scalar_lea.vmem %s2, %s238
      %p240 = pneg %p105
      %p241 = pneg %p102
      %p242 = pneg %p133
      %p243 = pneg %p130
      %p244 = scmp.lt.s32.totalorder %s20, 0
      %s245 = scalar_select %p244, %s20, 0
      %p246 = scmp.lt.s32.totalorder %s21, 1
      %s247 = scalar_select %p246, %s21, 1
      %s248 = smul.addr %s245, 2
      %s249 = sadd.s32 %s247, %s248
      %s250 = smul.addr %s249, 8
      %s251 = scalar_lea.vmem %s3, %s250
      %p252 = pneg %p161
      %p253 = pneg %p158
      %p254 = scmp.lt.s32.totalorder %s20, 0
      %s255 = scalar_select %p254, %s20, 0
      %p256 = scmp.lt.s32.totalorder %s21, 1
      %s257 = scalar_select %p256, %s21, 1
      %s258 = smul.addr %s255, 2
      %s259 = sadd.s32 %s257, %s258
      %s260 = smul.addr %s259, 8
      %s261 = scalar_lea.vmem %s4, %s260
      %p262 = scmp.lt.s32.totalorder %s20, 0
      %s263 = scalar_select %p262, %s20, 0
      %p264 = scmp.lt.s32.totalorder %s21, 1
      %s265 = scalar_select %p264, %s21, 1
      %s266 = smul.addr %s263, 2
      %s267 = sadd.s32 %s265, %s266
      %s268 = smul.addr %s267, 8
      %s269 = scalar_lea.vmem %s0, %s268
      %p270 = scmp.lt.s32.totalorder %s20, 0
      %s271 = scalar_select %p270, %s20, 0
      %p272 = scmp.lt.s32.totalorder %s21, 1
      %s273 = scalar_select %p272, %s21, 1
      %s274 = smul.addr %s271, 2
      %s275 = sadd.s32 %s273, %s274
      %s276 = smul.addr %s275, 8
      %s277 = scalar_lea.vmem %s1, %s276
      %p278 = scmp.lt.s32.totalorder %s20, 0
      %s279 = scalar_select %p278, %s20, 0
      %s280 = smul.addr %s279, 8
      %s281 = scalar_lea.vmem %s2, %s280
      %p282 = scmp.lt.s32.totalorder %s20, 0
      %s283 = scalar_select %p282, %s20, 0
      %p284 = scmp.lt.s32.totalorder %s21, 1
      %s285 = scalar_select %p284, %s21, 1
      %s286 = smul.addr %s283, 2
      %s287 = sadd.s32 %s285, %s286
      %s288 = smul.addr %s287, 8
      %s289 = scalar_lea.vmem %s3, %s288
      %p290 = scmp.lt.s32.totalorder %s20, 0
      %s291 = scalar_select %p290, %s20, 0
      %p292 = scmp.lt.s32.totalorder %s21, 1
      %s293 = scalar_select %p292, %s21, 1
      %s294 = smul.addr %s291, 2
      %s295 = sadd.s32 %s293, %s294
      %s296 = smul.addr %s295, 8
      %s297 = scalar_lea.vmem %s4, %s296
      %v298 = vld [vmem:[%s281] sm:$0xff]
      %v299 = vld [vmem:[%s269] sm:$0xff]
      %v300 = vld [vmem:[%s277] sm:$0xff]
      %vm301 = vcmp.ge.f32.partialorder %v299, 0.0
      %303 = vset.pattern.permute.xlu0 0
      %304 = vperm.xlu0 %303, %v298
      %v305 = vpop.permute.xlu0 %304
      %v307 = vmul.f32 %v305, %v299
      %v308 = vsel %vm301, %v299, %v307
      %309 = vst [vmem:[%s289] sm:$0xff] %v308
      %vm310 = vcmp.ge.f32.partialorder %v300, 0.0
      %v311 = vmul.f32 %v305, %v300
      %v312 = vsel %vm310, %v300, %v311
      %313 = vst [vmem:[%s297] sm:$0xff] %v312
      %p314 = scmp.lt.s32.totalorder %s20, 0
      %s315 = scalar_select %p314, %s20, 0
      %p316 = scmp.lt.s32.totalorder %s21, 1
      %s317 = scalar_select %p316, %s21, 1
      %s318 = smul.addr %s315, 2
      %s319 = sadd.s32 %s317, %s318
      %s320 = smul.addr %s319, 8
      %s321 = scalar_lea.vmem %s3, %s320
      %p322 = scmp.lt.s32.totalorder %s20, 0
      %s323 = scalar_select %p322, %s20, 0
      %p324 = scmp.lt.s32.totalorder %s21, 1
      %s325 = scalar_select %p324, %s21, 1
      %s326 = smul.addr %s323, 2
      %s327 = sadd.s32 %s325, %s326
      %s328 = smul.addr %s327, 8
      %s329 = scalar_lea.vmem %s4, %s328
      // Predicated region
      $region33: #{prelu_complex.1} parent=31 // pred_check
        %p330 = pneg %p130
      $region34: #{prelu_complex.1} parent=31 // pred_check_branch
        %332 = sbr.rel (%p330) target = $region36
      $region35: #{prelu_complex.1} parent=31 // pred_region
        _
      $region36: #{prelu_complex.1} parent=31 // pred_fallthru
        _
      // Predicated region
      $region37: #{prelu_complex.1} parent=31 // pred_check
        %p333 = pneg %p158
      $region38: #{prelu_complex.1} parent=31 // pred_check_branch
        %335 = sbr.rel (%p333) target = $region40
      $region39: #{prelu_complex.1} parent=31 // pred_region
        _
      $region40: #{prelu_complex.1} parent=31 // pred_fallthru
        _
    $region32: #{prelu_complex.1} parent=5 // pred_fallthru
      _
    %p336 = scmp.le.s32.totalorder 2, %s11
    // Predicated region
    $region41: #{prelu_complex.1} parent=5 // pred_check
      %p337 = pneg %p336
    $region42: #{prelu_complex.1} parent=5 // pred_check_branch
      %339 = sbr.rel (%p337) target = $region44
    $region43: #{prelu_complex.1} parent=5 // pred_region
      %s340 = ssub.s32 %s11, 2
      // Predicated region
      $region45: #{prelu_complex.1} parent=43 // pred_check
        %p341 = pneg %p136
      $region46: #{prelu_complex.1} parent=43 // pred_check_branch
        %343 = sbr.rel (%p341) target = $region48
      $region47: #{prelu_complex.1} parent=43 // pred_region
        %p344 = scmp.lt.s32.totalorder %s22, 0
        %s345 = scalar_select %p344, %s22, 0
        %p346 = scmp.lt.s32.totalorder %s23, 1
        %s347 = scalar_select %p346, %s23, 1
        %s348 = smul.addr %s345, 2
        %s349 = sadd.s32 %s347, %s348
        %s350 = smul.addr %s349, 8
        %s351 = scalar_lea.vmem %s3, %s350
      $region48: #{prelu_complex.1} parent=43 // pred_fallthru
        _
      // Predicated region
      $region49: #{prelu_complex.1} parent=43 // pred_check
        %p352 = pneg %p164
      $region50: #{prelu_complex.1} parent=43 // pred_check_branch
        %354 = sbr.rel (%p352) target = $region52
      $region51: #{prelu_complex.1} parent=43 // pred_region
        %p355 = scmp.lt.s32.totalorder %s22, 0
        %s356 = scalar_select %p355, %s22, 0
        %p357 = scmp.lt.s32.totalorder %s23, 1
        %s358 = scalar_select %p357, %s23, 1
        %s359 = smul.addr %s356, 2
        %s360 = sadd.s32 %s358, %s359
        %s361 = smul.addr %s360, 8
        %s362 = scalar_lea.vmem %s4, %s361
      $region52: #{prelu_complex.1} parent=43 // pred_fallthru
        _
    $region44: #{prelu_complex.1} parent=5 // pred_fallthru
      _
  $region6: #{prelu_complex.1} parent=0 // loop_footer
    %s15 = sadd.s32 1, %s11
  $region7: #{prelu_complex.1} parent=0 // loop_footer_branch
    %10 = sbr.rel target = $region3
  $region8: #{prelu_complex.1} parent=0 // loop_exit
    _

</llo_original>
